<compile_context>
chip_gen: v6e
topology: v6e:2x2x1
jax: 0.10.0
libtpu: 0.0.40
codegen_flags: <defaults>
</compile_context>

<pallas_src>
import math

import jax
import jax.numpy as jnp
from jax.experimental import pallas as pl
from jax.experimental.pallas import tpu as pltpu


def _round_up(x, m):
    return ((x + m - 1) // m) * m


def token_embed_kernel(x_ref, w_ref, o_ref):
    # x_ref: (tm, K)   im2col rows, K = 3*C_in
    # w_ref: (K, tn)   fused conv taps
    # o_ref: (tm, tn)
    o_ref[...] = jnp.dot(
        x_ref[...], w_ref[...], preferred_element_type=jnp.float32
    ).astype(o_ref.dtype)


def token_embedding(x, weight, *, tm_max=256, tn_max=256):
    """TokenEmbedding forward.

    x:      (B, L, C_in)  -- module input layout (before its internal permute)
    weight: (D, C_in, 3)  -- PyTorch Conv1d weight layout
    returns (B, L, D)
    """
    B, L, C_in = x.shape
    D = weight.shape[0]
    K = 3 * C_in

    # --- im2col glue: circular padding folded into rolls ---------------------
    # out[t] = x[(t-1)%L] @ w0 + x[t] @ w1 + x[(t+1)%L] @ w2
    x_cat = jnp.concatenate(
        [jnp.roll(x, 1, axis=1), x, jnp.roll(x, -1, axis=1)], axis=-1
    )                                   # (B, L, 3*C_in)
    x2d = x_cat.reshape(B * L, K)       # (M, K)

    # (D, C_in, 3) -> (3, C_in, D) -> (3*C_in, D): one fused matmul weight
    w2d = jnp.transpose(weight, (2, 1, 0)).reshape(K, D)

    # --- tiling: lane-dense, (8,128)-aligned ---------------------------------
    M = B * L
    tm = min(tm_max, _round_up(M, 8))
    M_pad = _round_up(M, tm)
    tn = min(tn_max, _round_up(D, 128))
    D_pad = _round_up(D, tn)

    if M_pad != M:
        x2d = jnp.pad(x2d, ((0, M_pad - M), (0, 0)))
    if D_pad != D:
        w2d = jnp.pad(w2d, ((0, 0), (0, D_pad - D)))

    grid = (M_pad // tm, D_pad // tn)

    out = pl.pallas_call(
        token_embed_kernel,
        out_shape=jax.ShapeDtypeStruct((M_pad, D_pad), x.dtype),
        grid_spec=pltpu.PrefetchScalarGridSpec(
            num_scalar_prefetch=0,
            grid=grid,
            in_specs=[
                pl.BlockSpec((tm, K), lambda i, j: (i, 0)),   # K kept whole (tiny)
                pl.BlockSpec((K, tn), lambda i, j: (0, j)),
            ],
            out_specs=pl.BlockSpec((tm, tn), lambda i, j: (i, j)),
        ),
        compiler_params=pltpu.CompilerParams(
            dimension_semantics=("parallel", "parallel")),
    )(x2d, w2d)

    return out[:M, :D].reshape(B, L, D)


def init_weight(key, input_dim, model_dim):
    # kaiming_normal_(mode='fan_in', nonlinearity='leaky_relu', a=0.01 default)
    fan_in = input_dim * 3
    gain = math.sqrt(2.0 / (1.0 + 0.01 ** 2))
    std = gain / math.sqrt(fan_in)
    return std * jax.random.normal(key, (model_dim, input_dim, 3), dtype=jnp.float32)


def reference(x, weight):
    # pure-JAX reference of the circular conv for a correctness check
    w = jnp.transpose(weight, (2, 1, 0))  # (3, C_in, D)
    xm1 = jnp.roll(x, 1, axis=1)   # x[(t-1) mod L]
    xp1 = jnp.roll(x, -1, axis=1)  # x[(t+1) mod L]
    return (jnp.einsum('blc,cd->bld', xm1, w[0]) +
            jnp.einsum('blc,cd->bld', x,   w[1]) +
            jnp.einsum('blc,cd->bld', xp1, w[2]))


if __name__ == "__main__":
    B, L, C_in, D = 2, 8, 4, 32
    key = jax.random.PRNGKey(0)
    kx, kw = jax.random.split(key)
    x = jax.random.normal(kx, (B, L, C_in), dtype=jnp.float32)
    weight = init_weight(kw, C_in, D)

    out = token_embedding(x, weight)
    out = jax.block_until_ready(out)

    ref = reference(x, weight)
    assert out.shape == (B, L, D)
    assert jnp.allclose(out, ref, atol=1e-5, rtol=1e-5)
    print("KERNEL_OK")
</pallas_src>

<mosaic_0001>
module attributes {stable_mosaic.version = 11 : i64} {
  func.func @token_embed_kernel(%arg0: i32, %arg1: i32, %arg2: memref<16x12xf32, #tpu.memory_space<vmem>>, %arg3: memref<12x128xf32, #tpu.memory_space<vmem>>, %arg4: memref<16x128xf32, #tpu.memory_space<vmem>>) attributes {dimension_semantics = [#tpu.dimension_semantics<parallel>, #tpu.dimension_semantics<parallel>], iteration_bounds = array<i64: 1, 1>, scalar_prefetch = 0 : i64, scratch_operands = 0 : i64, tpu.core_type = #tpu.core_type<tc>, window_params = [{transform_indices = @transform_0, window_bounds = array<i64: 16, 12>}, {transform_indices = @transform_1, window_bounds = array<i64: 12, 128>}, {transform_indices = @transform_2, window_bounds = array<i64: 16, 128>}]} {
    %c0 = arith.constant 0 : index
    %c0_0 = arith.constant 0 : index
    %0 = vector.load %arg2[%c0, %c0_0] : memref<16x12xf32, #tpu.memory_space<vmem>>, vector<16x12xf32>
    %c0_1 = arith.constant 0 : index
    %c0_2 = arith.constant 0 : index
    %1 = vector.load %arg3[%c0_1, %c0_2] : memref<12x128xf32, #tpu.memory_space<vmem>>, vector<12x128xf32>
    %cst = arith.constant dense<0.000000e+00> : vector<16x128xf32>
    %2 = tpu.matmul %0, %1, %cst {dimension_numbers = #tpu.dot_dimension_numbers<[1], [0], [0], [1], [0, 0, 1, 1], [], []>} : vector<16x12xf32>, vector<12x128xf32>, vector<16x128xf32> -> vector<16x128xf32>
    %c0_3 = arith.constant 0 : index
    %c0_4 = arith.constant 0 : index
    %3 = vector.load %arg4[%c0_3, %c0_4] : memref<16x128xf32, #tpu.memory_space<vmem>>, vector<16x128xf32>
    tpu.vector_store %arg4[%c0_3, %c0_4], %2 {strides = array<i32>} : memref<16x128xf32, #tpu.memory_space<vmem>>, vector<16x128xf32>,
    return
  }
  func.func @transform_0(%arg0: i32, %arg1: i32) -> (i32, i32) {
    %c0_i32 = arith.constant 0 : i32
    %c0_i32_0 = arith.constant 0 : i32
    return %arg0, %c0_i32 : i32, i32
  }
  func.func @transform_1(%arg0: i32, %arg1: i32) -> (i32, i32) {
    %c0_i32 = arith.constant 0 : i32
    %c0_i32_0 = arith.constant 0 : i32
    return %c0_i32, %arg1 : i32, i32
  }
  func.func @transform_2(%arg0: i32, %arg1: i32) -> (i32, i32) {
    %c0_i32 = arith.constant 0 : i32
    return %arg0, %arg1 : i32, i32
  }
}

</mosaic_0001>

<llo_original>
// kernel: tpu_custom_call.1
$region0: #{tpu_custom_call.1}
  #allocation0 [shape = 'u32[]', space=smem, size = 0x4, offset = 0x4, fixed_abs, tag = 'smem constant byte address 0x4 - core index']
  #allocation1 [shape = 'u32[144,128]{1,0:T(1,128)}', space=vmem, size = 0x12000, scoped, tag = 'internal scratch']
  %s0 = inlined_call_operand.hbm [shape: f32[16,12], index: 0, kind: input, shape index: {}]
  %s1 = inlined_call_operand.hbm [shape: f32[12,128], index: 1, kind: input, shape index: {}]
  %s2 = inlined_call_operand.hbm [shape: f32[16,128], index: 2, kind: output, shape index: {}]
  %s3 = sld [smem:[#allocation0]]
  $region26: #{tpu_custom_call.1} parent=0
    _
  %s5 = ssub.s32 1, %s3
  %s6 = scalar_select 0, %s5, %s3
  $region1: #{tpu_custom_call.1} parent=0
    #allocation2 [shape = 'u8[8192]{0}', space=vmem, size = 0x2000, scoped, tag = 'input window, operand 0, single buffered']
    #allocation3 [shape = 's32[1]{0}', space=sflag, size = 0x4, scoped, tag = 'scoped memory for tpu_custom_call.1']
    #allocation4 [shape = 's32[1]{0}', space=sflag, size = 0x4, scoped, tag = 'scoped memory for tpu_custom_call.1']
    #allocation5 [shape = 'u8[8192]{0}', space=vmem, size = 0x2000, scoped, tag = 'input window, operand 1, single buffered']
    #allocation6 [shape = 's32[1]{0}', space=sflag, size = 0x4, scoped, tag = 'scoped memory for tpu_custom_call.1']
    #allocation7 [shape = 'u8[8192]{0}', space=vmem, size = 0x2000, scoped, tag = 'output window, operand 0, single buffered']
    %7 = vsyncpa [#allocation3], 0
    %8 = vsyncpa [#allocation6], 0
    %9 = vsyncpa [#allocation4], 0
    // Predicated region
    $region2: #{tpu_custom_call.1} parent=1 // pred_check
      _
    $region3: #{tpu_custom_call.1} parent=1 // pred_check_branch
      %11 = sbr.rel (0) target = $region5
    $region4: #{tpu_custom_call.1} parent=1 // pred_region
      %s13 = ssub.s32 256, 256
      %14 = vsyncadd [#allocation3], %s13
      %s15 = sshll.u32 [#allocation2], 4
      %s16 = int_to_ptr.vmem [resolvable:$true] %s15
      %21 = dma.hbm_to_vmem [thread:$0]  %s0, 256, %s16, [#allocation3], 128, 128, 8
    $region5: #{tpu_custom_call.1} parent=1 // pred_fallthru
      _
    // Predicated region
    $region6: #{tpu_custom_call.1} parent=1 // pred_check
      _
    $region7: #{tpu_custom_call.1} parent=1 // pred_check_branch
      %23 = sbr.rel (0) target = $region9
    $region8: #{tpu_custom_call.1} parent=1 // pred_region
      %s25 = ssub.s32 256, 256
      %26 = vsyncadd [#allocation6], %s25
      %s27 = sshll.u32 [#allocation5], 4
      %s28 = int_to_ptr.vmem [resolvable:$true] %s27
      %33 = dma.hbm_to_vmem [thread:$0]  %s1, 256, %s28, [#allocation6], 128, 128, 8
    $region9: #{tpu_custom_call.1} parent=1 // pred_fallthru
      _
    // Predicated region
    $region10: #{tpu_custom_call.1} parent=1 // pred_check
      _
    $region11: #{tpu_custom_call.1} parent=1 // pred_check_branch
      %35 = sbr.rel (0) target = $region13
    $region12: #{tpu_custom_call.1} parent=1 // pred_region
      %36 = dma.done [#allocation3], 256
    $region13: #{tpu_custom_call.1} parent=1 // pred_fallthru
      _
    // Predicated region
    $region14: #{tpu_custom_call.1} parent=1 // pred_check
      _
    $region15: #{tpu_custom_call.1} parent=1 // pred_check_branch
      %38 = sbr.rel (0) target = $region17
    $region16: #{tpu_custom_call.1} parent=1 // pred_region
      %39 = dma.done [#allocation6], 256
    $region17: #{tpu_custom_call.1} parent=1 // pred_fallthru
      _
    %v40 = vld [vmem:[#allocation2] sm:$0xff]
    %v41 = vld [vmem:[#allocation2 + $0x8] sm:$0xff]
    %v42 = vld [vmem:[#allocation5] sm:$0xff]
    %v43 = vld [vmem:[#allocation5 + $0x8] sm:$0xf]
    %vm44 = vcmask 97280
    %v46 = vsel %vm44, %v40, 0
    %v49 = vsel %vm44, %v41, 0
    %vm51 = vcmask 1043456
    %v53 = vsel %vm51, %v43, 0
    %55 = vmatprep.subr.mxu0 0.0
    %56 = vmatpush1.msra.mxu0 0.0
    %57 = vmatprep.subr.mxu0 0.0
    %58 = vmatpush1.msra.mxu0 0.0
    %59 = vmatprep.subr.mxu0 0.0
    %60 = vmatpush1.msra.mxu0 0.0
    %61 = vmatprep.subr.mxu0 0.0
    %62 = vmatpush1.msra.mxu0 0.0
    %63 = vmatprep.subr.mxu0 0.0
    %64 = vmatpush1.msra.mxu0 0.0
    %65 = vmatprep.subr.mxu0 0.0
    %66 = vmatpush1.msra.mxu0 0.0
    %67 = vmatprep.subr.mxu0 0.0
    %68 = vmatpush1.msra.mxu0 0.0
    %69 = vmatprep.subr.mxu0 0.0
    %70 = vmatpush1.msra.mxu0 0.0
    %71 = vmatprep.subr.mxu0 0.0
    %72 = vmatpush1.msra.mxu0 0.0
    %73 = vmatprep.subr.mxu0 0.0
    %74 = vmatpush1.msra.mxu0 0.0
    %75 = vmatprep.subr.mxu0 0.0
    %76 = vmatpush1.msra.mxu0 0.0
    %77 = vmatprep.subr.mxu0 0.0
    %78 = vmatpush1.msra.mxu0 0.0
    %79 = vmatprep.subr.mxu0 0.0
    %80 = vmatpush1.msra.mxu0 0.0
    %81 = vmatprep.subr.mxu0 0.0
    %82 = vmatpush1.msra.mxu0 0.0
    %83 = vmatprep.subr.mxu0 0.0
    %84 = vmatpush1.msra.mxu0 %v53
    %85 = vmatprep.subr.mxu0 0.0
    %86 = vmatpush1.msra.mxu0 %v42
    %87 = vmatprep.subr.mxu0 0.0
    %88 = vmatpush2.msra.mxu0 0.0
    %89 = vmatprep.subr.mxu0 0.0
    %90 = vmatpush2.msra.mxu0 0.0
    %91 = vmatprep.subr.mxu0 0.0
    %92 = vmatpush2.msra.mxu0 0.0
    %93 = vmatprep.subr.mxu0 0.0
    %94 = vmatpush2.msra.mxu0 0.0
    %95 = vmatprep.subr.mxu0 0.0
    %96 = vmatpush2.msra.mxu0 0.0
    %97 = vmatprep.subr.mxu0 0.0
    %98 = vmatpush2.msra.mxu0 0.0
    %99 = vmatprep.subr.mxu0 0.0
    %100 = vmatpush2.msra.mxu0 0.0
    %101 = vmatprep.subr.mxu0 0.0
    %102 = vmatpush2.msra.mxu0 0.0
    %103 = vmatprep.subr.mxu0 0.0
    %104 = vmatpush2.msra.mxu0 0.0
    %105 = vmatprep.subr.mxu0 0.0
    %106 = vmatpush2.msra.mxu0 0.0
    %107 = vmatprep.subr.mxu0 0.0
    %108 = vmatpush2.msra.mxu0 0.0
    %109 = vmatprep.subr.mxu0 0.0
    %110 = vmatpush2.msra.mxu0 0.0
    %111 = vmatprep.subr.mxu0 0.0
    %112 = vmatpush2.msra.mxu0 0.0
    %113 = vmatprep.subr.mxu0 0.0
    %114 = vmatpush2.msra.mxu0 0.0
    %115 = vmatprep.subr.mxu0 0.0
    %116 = vmatpush2.msra.mxu0 0.0
    %117 = vmatprep.subr.mxu0 0.0
    %118 = vmatpush2.msra.mxu0 0.0
    %119 = vmatprep.mubr.f32.mxu0 0.0
    %120 = vmatmul.mubr.f32.gmra.mxu0 %v46
    %v121 = vpop.f32.mrf.mxu0
    %v122 = vadd.f32 0.0, %v121
    %v123 = vpop.f32.mrf.mxu0
    %124 = vmatprep.mubr.f32.mxu0 0.0
    %125 = vmatmul.mubr.f32.gmra.mxu0 %v49
    %v126 = vpop.f32.mrf.mxu0
    %v127 = vadd.f32 0.0, %v126
    %v128 = vpop.f32.mrf.mxu0
    %129 = vdwg.mxu0
    %130 = vst [vmem:[#allocation7] sm:$0xff] %v122
    %131 = vst [vmem:[#allocation7 + $0x8] sm:$0xff] %v127
    // Predicated region
    $region18: #{tpu_custom_call.1} parent=1 // pred_check
      _
    $region19: #{tpu_custom_call.1} parent=1 // pred_check_branch
      %133 = sbr.rel (0) target = $region21
    $region20: #{tpu_custom_call.1} parent=1 // pred_region
      %s135 = ssub.s32 256, 256
      %136 = vsyncadd [#allocation4], %s135
      %s137 = sshll.u32 [#allocation7], 4
      %s138 = int_to_ptr.vmem [resolvable:$true] %s137
      %143 = dma.vmem_to_hbm [thread:$0]  %s138, 256, %s2, [#allocation4], 128, 128, 8
    $region21: #{tpu_custom_call.1} parent=1 // pred_fallthru
      _
    // Predicated region
    $region22: #{tpu_custom_call.1} parent=1 // pred_check
      _
    $region23: #{tpu_custom_call.1} parent=1 // pred_check_branch
      %145 = sbr.rel (0) target = $region25
    $region24: #{tpu_custom_call.1} parent=1 // pred_region
      %146 = dma.done [#allocation4], 256
    $region25: #{tpu_custom_call.1} parent=1 // pred_fallthru
      _
    %147 = vsyncpa [#allocation3], 1
    %148 = vsyncpa [#allocation6], 1
    %149 = vsyncpa [#allocation4], 1

</llo_original>
